<compile_context>
chip_gen: v7x
topology: tpu7x:2x2x1
jax: 0.10.0
libtpu: 0.0.40
codegen_flags: <defaults>
</compile_context>

<pallas_src>
import functools

import jax
import jax.numpy as jnp
from jax import lax
from jax.experimental import pallas as pl
from jax.experimental.pallas import tpu as pltpu


def _round_up(x, m):
    return ((x + m - 1) // m) * m


def _pick_tile(padded_dim, max_tile):
    """Largest multiple of 128 <= max_tile that exactly divides padded_dim
    (padded_dim is itself a multiple of 128, so 128 always works)."""
    if padded_dim <= max_tile:
        return padded_dim
    for t in range(max_tile, 127, -128):
        if padded_dim % t == 0:
            return t
    return 128


# ---------------------------------------------------------------------------
# Kernels
# ---------------------------------------------------------------------------
def _l_guidance_kernel_direct(x_ref, w_ref, b_ref, g_ref, o_ref):
    """f32 output: accumulate straight into o_ref (no scratch copy pass)."""
    k = pl.program_id(2)

    @pl.when(k == 0)
    def _():
        o_ref[...] = jnp.zeros_like(o_ref)

    # Canonical [M,K] x [K,N] on the MXU; no per-step RHS transpose.
    o_ref[...] += jnp.dot(x_ref[...], w_ref[...],
                          preferred_element_type=jnp.float32)

    @pl.when(k == pl.num_programs(2) - 1)
    def _():
        # Epilogue rides in VPU slots: (acc + b) * guidance.
        o_ref[...] = (o_ref[...] + b_ref[...]) * g_ref[...]


def _l_guidance_kernel_scratch(x_ref, w_ref, b_ref, g_ref, o_ref, acc_ref):
    """Narrow (e.g. bf16) output: f32 accumulator in VMEM scratch."""
    k = pl.program_id(2)

    @pl.when(k == 0)
    def _():
        acc_ref[...] = jnp.zeros_like(acc_ref)

    acc_ref[...] += jnp.dot(x_ref[...], w_ref[...],
                            preferred_element_type=jnp.float32)

    @pl.when(k == pl.num_programs(2) - 1)
    def _():
        o_ref[...] = ((acc_ref[...] + b_ref[...]) * g_ref[...]).astype(o_ref.dtype)


# ---------------------------------------------------------------------------
# One-time parameter preparation (hoisted out of the per-call path)
# ---------------------------------------------------------------------------
def prepare_l_guidance(weight, bias, guidance, *, compute_dtype=jnp.bfloat16):
    """weight: [F_out, F_in] (PyTorch layout).  Returns:
       w_kn : [Kp, Np] compute_dtype  (transposed + 128-padded, done ONCE)
       b_row, g_row : [1, Np] f32 bias / guidance rows."""
    F_out, F_in = weight.shape
    Np = _round_up(F_out, 128)
    Kp = _round_up(F_in, 128)
    w_kn = jnp.pad(weight.T.astype(compute_dtype),
                   ((0, Kp - F_in), (0, Np - F_out)))
    b_row = jnp.pad(bias.astype(jnp.float32).reshape(1, F_out),
                    ((0, 0), (0, Np - F_out)))
    g_row = jnp.pad(guidance.astype(jnp.float32).reshape(1, F_out),
                    ((0, 0), (0, Np - F_out)))
    return w_kn, b_row, g_row


# ---------------------------------------------------------------------------
# Forward with pre-prepared parameters
# ---------------------------------------------------------------------------
@functools.partial(jax.jit, static_argnames=("f_out", "tm", "tn", "tk"))
def l_guidance_apply(x, w_kn, b_row, g_row, *, f_out, tm=None, tn=None, tk=None):
    """x: [B, F_in]; w_kn: [Kp, Np] (prepared); b_row/g_row: [1, Np]."""
    B, F_in = x.shape
    Kp, Np = w_kn.shape
    out_dtype = x.dtype
    compute_dtype = w_kn.dtype

    # --- tile selection ----------------------------------------------------
    if tm is None:
        tm = min(256, _round_up(B, 16))          # sublane-pair friendly for bf16
    Mp = _round_up(B, tm)

    if tn is None:
        tn = _pick_tile(Np, 512)
        # v7x (2 TensorCores): keep >=2 tiles on a "parallel" axis when B small.
        if Mp // tm == 1:
            while tn > 128 and Np // tn < 2:
                cand = _pick_tile(Np, tn - 128)
                if cand >= tn:
                    break
                tn = cand
    if tk is None:
        tk = _pick_tile(Kp, 2048)                # bf16: ~7 MiB double-buffered

    # --- pad + cast activations (weight already prepared, no per-call pad) --
    xp = x.astype(compute_dtype)
    if Mp != B or Kp != F_in:
        xp = jnp.pad(xp, ((0, Mp - B), (0, Kp - F_in)))

    grid = (Mp // tm, Np // tn, Kp // tk)

    in_itemsize = jnp.dtype(compute_dtype).itemsize
    cost = pl.CostEstimate(
        flops=2 * Mp * Np * Kp,
        transcendentals=0,
        bytes_accessed=((Np // tn) * Mp * Kp * in_itemsize      # x re-streamed per N tile
                        + (Mp // tm) * Np * Kp * in_itemsize    # W re-streamed per M tile
                        + Mp * Np * jnp.dtype(out_dtype).itemsize
                        + 2 * Np * 4),
    )

    direct = (out_dtype == jnp.float32)
    kernel = _l_guidance_kernel_direct if direct else _l_guidance_kernel_scratch
    scratch = [] if direct else [pltpu.VMEM((tm, tn), jnp.float32)]

    out = pl.pallas_call(
        kernel,
        out_shape=jax.ShapeDtypeStruct((Mp, Np), out_dtype),
        grid_spec=pltpu.PrefetchScalarGridSpec(
            num_scalar_prefetch=0,
            grid=grid,
            in_specs=[
                pl.BlockSpec((tm, tk), lambda i, j, k: (i, k)),   # x    [M, K]
                pl.BlockSpec((tk, tn), lambda i, j, k: (k, j)),   # W    [K, N]
                pl.BlockSpec((1, tn), lambda i, j, k: (0, j)),    # bias [1, N]
                pl.BlockSpec((1, tn), lambda i, j, k: (0, j)),    # guid [1, N]
            ],
            out_specs=pl.BlockSpec((tm, tn), lambda i, j, k: (i, j)),
            scratch_shapes=scratch,
        ),
        compiler_params=pltpu.CompilerParams(
            dimension_semantics=("parallel", "parallel", "arbitrary")),
        cost_estimate=cost,
    )(xp, w_kn, b_row, g_row)

    if Mp != B or Np != f_out:
        out = out[:B, :f_out]
    return out


# ---------------------------------------------------------------------------
# Drop-in convenience wrapper (prepares params per call; prefer caching
# prepare_l_guidance() output across calls)
# ---------------------------------------------------------------------------
def l_guidance_forward(x, weight, bias, guidance, *, tm=None, tn=None, tk=None):
    F_out, F_in = weight.shape
    lead_shape = None
    if x.ndim > 2:
        lead_shape = x.shape[:-1]
        x = x.reshape(-1, F_in)
    w_kn, b_row, g_row = prepare_l_guidance(weight, bias, guidance)
    out = l_guidance_apply(x, w_kn, b_row, g_row, f_out=F_out, tm=tm, tn=tn, tk=tk)
    if lead_shape is not None:
        out = out.reshape(*lead_shape, F_out)
    return out


if __name__ == "__main__":
    key = jax.random.PRNGKey(0)
    ks = jax.random.split(key, 8)

    # --- Small module-scale check (single-tile grid) -------------------------
    B, F_in, F_out = 8, 32, 32
    x = jax.random.normal(ks[0], (B, F_in), dtype=jnp.float32)
    weight = jax.random.normal(ks[1], (F_out, F_in), dtype=jnp.float32) / jnp.sqrt(F_in)
    bias = jax.random.normal(ks[2], (F_out,), dtype=jnp.float32) * 0.01
    guidance = jax.random.normal(ks[3], (F_out,), dtype=jnp.float32)

    out = l_guidance_forward(x, weight, bias, guidance)
    jax.block_until_ready(out)
    ref = (x @ weight.T + bias) * guidance
    assert out.shape == ref.shape
    rel = jnp.max(jnp.abs(out - ref)) / (jnp.max(jnp.abs(ref)) + 1e-6)
    # bf16 weight/activation stream with f32 accumulation -> ~1e-3..1e-2 rel err.
    assert rel < 2e-2, f"small-shape mismatch vs reference (rel_err={rel})"

    # --- Larger check: multi-tile N/K grid, K accumulation, padding, cached prep
    B2, F_in2, F_out2 = 40, 2560, 384
    x2 = jax.random.normal(ks[4], (B2, F_in2), dtype=jnp.float32)
    w2 = jax.random.normal(ks[5], (F_out2, F_in2), dtype=jnp.float32) / jnp.sqrt(F_in2)
    b2 = jax.random.normal(ks[6], (F_out2,), dtype=jnp.float32) * 0.01
    g2 = jax.random.normal(ks[7], (F_out2,), dtype=jnp.float32)

    w_kn, b_row, g_row = prepare_l_guidance(w2, b2, g2)   # prepared once, reused
    out2 = l_guidance_apply(x2, w_kn, b_row, g_row, f_out=F_out2)
    jax.block_until_ready(out2)
    ref2 = (jnp.dot(x2, w2.T, precision=lax.Precision.HIGHEST) + b2) * g2
    rel2 = jnp.max(jnp.abs(out2 - ref2)) / (jnp.max(jnp.abs(ref2)) + 1e-6)
    assert rel2 < 2e-2, f"tiled-shape mismatch vs reference (rel_err={rel2})"

    print("KERNEL_OK")
</pallas_src>

<mosaic_0001>
module attributes {stable_mosaic.version = 11 : i64} {
  func.func @_l_guidance_kernel_direct(%arg0: i32, %arg1: i32, %arg2: i32, %arg3: memref<16x128xbf16, #tpu.memory_space<vmem>>, %arg4: memref<128x128xbf16, #tpu.memory_space<vmem>>, %arg5: memref<1x128xf32, #tpu.memory_space<vmem>>, %arg6: memref<1x128xf32, #tpu.memory_space<vmem>>, %arg7: memref<16x128xf32, #tpu.memory_space<vmem>>) attributes {dimension_semantics = [#tpu.dimension_semantics<parallel>, #tpu.dimension_semantics<parallel>, #tpu.dimension_semantics<arbitrary>], iteration_bounds = array<i64: 1, 1, 1>, scalar_prefetch = 0 : i64, scratch_operands = 0 : i64, tpu.core_type = #tpu.core_type<tc>, window_params = [{transform_indices = @transform_0, window_bounds = array<i64: 16, 128>}, {transform_indices = @transform_1, window_bounds = array<i64: 128, 128>}, {transform_indices = @transform_2, window_bounds = array<i64: 1, 128>}, {transform_indices = @transform_3, window_bounds = array<i64: 1, 128>}, {transform_indices = @transform_4, window_bounds = array<i64: 16, 128>}]} {
    %c0_i32 = arith.constant 0 : i32
    %0 = arith.cmpi eq, %arg2, %c0_i32 : i32
    %1 = arith.extui %0 : i1 to i32
    %c0_i32_0 = arith.constant 0 : i32
    %2 = arith.cmpi ne, %1, %c0_i32_0 : i32
    scf.if %2 {
      %cst_10 = arith.constant 0.000000e+00 : f32
      %12 = vector.broadcast %cst_10 : f32 to vector<16x128xf32>
      %c0_11 = arith.constant 0 : index
      %c0_12 = arith.constant 0 : index
      %13 = vector.load %arg7[%c0_11, %c0_12] : memref<16x128xf32, #tpu.memory_space<vmem>>, vector<16x128xf32>
      tpu.vector_store %arg7[%c0_11, %c0_12], %12 {strides = array<i32>} : memref<16x128xf32, #tpu.memory_space<vmem>>, vector<16x128xf32>,
    } else {
    }
    %c0 = arith.constant 0 : index
    %c0_1 = arith.constant 0 : index
    %3 = vector.load %arg7[%c0, %c0_1] : memref<16x128xf32, #tpu.memory_space<vmem>>, vector<16x128xf32>
    %c0_2 = arith.constant 0 : index
    %c0_3 = arith.constant 0 : index
    %4 = vector.load %arg3[%c0_2, %c0_3] : memref<16x128xbf16, #tpu.memory_space<vmem>>, vector<16x128xbf16>
    %c0_4 = arith.constant 0 : index
    %c0_5 = arith.constant 0 : index
    %5 = vector.load %arg4[%c0_4, %c0_5] : memref<128x128xbf16, #tpu.memory_space<vmem>>, vector<128x128xbf16>
    %cst = arith.constant dense<0.000000e+00> : vector<16x128xf32>
    %6 = tpu.matmul %4, %5, %cst {dimension_numbers = #tpu.dot_dimension_numbers<[1], [0], [0], [1], [0, 0, 1, 1], [], []>} : vector<16x128xbf16>, vector<128x128xbf16>, vector<16x128xf32> -> vector<16x128xf32>
    %7 = arith.addf %3, %6 : vector<16x128xf32>
    %c0_6 = arith.constant 0 : index
    %c0_7 = arith.constant 0 : index
    %8 = vector.load %arg7[%c0_6, %c0_7] : memref<16x128xf32, #tpu.memory_space<vmem>>, vector<16x128xf32>
    tpu.vector_store %arg7[%c0_6, %c0_7], %7 {strides = array<i32>} : memref<16x128xf32, #tpu.memory_space<vmem>>, vector<16x128xf32>,
    %c0_i32_8 = arith.constant 0 : i32
    %9 = arith.cmpi eq, %arg2, %c0_i32_8 : i32
    %10 = arith.extui %9 : i1 to i32
    %c0_i32_9 = arith.constant 0 : i32
    %11 = arith.cmpi ne, %10, %c0_i32_9 : i32
    scf.if %11 {
      %c0_10 = arith.constant 0 : index
      %c0_11 = arith.constant 0 : index
      %12 = vector.load %arg7[%c0_10, %c0_11] : memref<16x128xf32, #tpu.memory_space<vmem>>, vector<16x128xf32>
      %c0_12 = arith.constant 0 : index
      %c0_13 = arith.constant 0 : index
      %13 = vector.load %arg5[%c0_12, %c0_13] : memref<1x128xf32, #tpu.memory_space<vmem>>, vector<1x128xf32>
      %14 = vector.broadcast %13 : vector<1x128xf32> to vector<16x128xf32>
      %15 = arith.addf %12, %14 : vector<16x128xf32>
      %c0_14 = arith.constant 0 : index
      %c0_15 = arith.constant 0 : index
      %16 = vector.load %arg6[%c0_14, %c0_15] : memref<1x128xf32, #tpu.memory_space<vmem>>, vector<1x128xf32>
      %17 = vector.broadcast %16 : vector<1x128xf32> to vector<16x128xf32>
      %18 = arith.mulf %15, %17 : vector<16x128xf32>
      %c0_16 = arith.constant 0 : index
      %c0_17 = arith.constant 0 : index
      %19 = vector.load %arg7[%c0_16, %c0_17] : memref<16x128xf32, #tpu.memory_space<vmem>>, vector<16x128xf32>
      tpu.vector_store %arg7[%c0_16, %c0_17], %18 {strides = array<i32>} : memref<16x128xf32, #tpu.memory_space<vmem>>, vector<16x128xf32>,
    } else {
    }
    return
  }
  func.func @transform_0(%arg0: i32, %arg1: i32, %arg2: i32) -> (i32, i32) {
    %c0_i32 = arith.constant 0 : i32
    return %arg0, %arg2 : i32, i32
  }
  func.func @transform_1(%arg0: i32, %arg1: i32, %arg2: i32) -> (i32, i32) {
    %c0_i32 = arith.constant 0 : i32
    return %arg2, %arg1 : i32, i32
  }
  func.func @transform_2(%arg0: i32, %arg1: i32, %arg2: i32) -> (i32, i32) {
    %c0_i32 = arith.constant 0 : i32
    %c0_i32_0 = arith.constant 0 : i32
    return %c0_i32, %arg1 : i32, i32
  }
  func.func @transform_3(%arg0: i32, %arg1: i32, %arg2: i32) -> (i32, i32) {
    %c0_i32 = arith.constant 0 : i32
    %c0_i32_0 = arith.constant 0 : i32
    return %c0_i32, %arg1 : i32, i32
  }
  func.func @transform_4(%arg0: i32, %arg1: i32, %arg2: i32) -> (i32, i32) {
    %c0_i32 = arith.constant 0 : i32
    return %arg0, %arg1 : i32, i32
  }
}

</mosaic_0001>

<llo_original>
// kernel: l_guidance_apply.1
$region0: #{l_guidance_apply.1}
  #allocation0 [shape = 'u32[]', space=smem, size = 0x4, offset = 0x4, fixed_abs, tag = 'smem constant byte address 0x4 - core index']
  #allocation1 [shape = 'u32[144,128]{1,0:T(1,128)}', space=vmem, size = 0x12000, scoped, tag = 'internal scratch']
  %s0 = inlined_call_operand.vmem [shape: bf16[16,128], index: 0, kind: input, shape index: {}]
  %s1 = inlined_call_operand.hbm [shape: bf16[128,128], index: 1, kind: input, shape index: {}]
  %s2 = inlined_call_operand.vmem [shape: f32[1,128], index: 2, kind: input, shape index: {}]
  %s3 = inlined_call_operand.vmem [shape: f32[1,128], index: 3, kind: input, shape index: {}]
  %s4 = inlined_call_operand.vmem [shape: f32[16,128], index: 4, kind: output, shape index: {}]
  %s5 = sld [smem:[#allocation0]]
  $region38: #{l_guidance_apply.1} parent=0
    _
  %s7 = ssub.s32 1, %s5
  %s8 = scalar_select 0, %s7, %s5
  $region1: #{l_guidance_apply.1} parent=0
    #allocation2 [shape = 'u8[32768]{0}', space=vmem, size = 0x8000, scoped, tag = 'input window, operand 1, single buffered']
    #allocation3 [shape = 's32[1]{0}', space=sflag, size = 0x4, scoped, tag = 'scoped memory for l_guidance_apply.1']
    %9 = vsyncpa [#allocation3], 0
    // Predicated region
    $region2: #{l_guidance_apply.1} parent=1 // pred_check
      _
    $region3: #{l_guidance_apply.1} parent=1 // pred_check_branch
      %11 = sbr.rel (0) target = $region5
    $region4: #{l_guidance_apply.1} parent=1 // pred_region
      _
    $region5: #{l_guidance_apply.1} parent=1 // pred_fallthru
      _
    // Predicated region
    $region6: #{l_guidance_apply.1} parent=1 // pred_check
      _
    $region7: #{l_guidance_apply.1} parent=1 // pred_check_branch
      %13 = sbr.rel (0) target = $region9
    $region8: #{l_guidance_apply.1} parent=1 // pred_region
      %s15 = ssub.s32 1024, 1024
      %16 = vsyncadd [#allocation3], %s15
      %s17 = sshll.u32 [#allocation2], 4
      %s18 = int_to_ptr.vmem [resolvable:$true] %s17
      %23 = dma.hbm_to_vmem [thread:$0]  %s1, 1024, %s18, [#allocation3], 64, 64, 4
    $region9: #{l_guidance_apply.1} parent=1 // pred_fallthru
      _
    // Predicated region
    $region10: #{l_guidance_apply.1} parent=1 // pred_check
      _
    $region11: #{l_guidance_apply.1} parent=1 // pred_check_branch
      %25 = sbr.rel (0) target = $region13
    $region12: #{l_guidance_apply.1} parent=1 // pred_region
      _
    $region13: #{l_guidance_apply.1} parent=1 // pred_fallthru
      _
    // Predicated region
    $region14: #{l_guidance_apply.1} parent=1 // pred_check
      _
    $region15: #{l_guidance_apply.1} parent=1 // pred_check_branch
      %27 = sbr.rel (0) target = $region17
    $region16: #{l_guidance_apply.1} parent=1 // pred_region
      _
    $region17: #{l_guidance_apply.1} parent=1 // pred_fallthru
      _
    // Predicated region
    $region18: #{l_guidance_apply.1} parent=1 // pred_check
      _
    $region19: #{l_guidance_apply.1} parent=1 // pred_check_branch
      %29 = sbr.rel (0) target = $region21
    $region20: #{l_guidance_apply.1} parent=1 // pred_region
      %30 = dma.done [#allocation3], 1024
    $region21: #{l_guidance_apply.1} parent=1 // pred_fallthru
      _
    %p32 = scmp.eq.s32.totalorder 0, 0
    // Predicated region
    $region22: #{l_guidance_apply.1} parent=1 // pred_check
      %p33 = pneg %p32
    $region23: #{l_guidance_apply.1} parent=1 // pred_check_branch
      %35 = sbr.rel (%p33) target = $region25
    $region24: #{l_guidance_apply.1} parent=1 // pred_region
      %36 = vst [vmem:[%s4] sm:$0xff] 0.0
      %37 = vst [vmem:[%s4 + $0x8] sm:$0xff] 0.0
    $region25: #{l_guidance_apply.1} parent=1 // pred_fallthru
      _
    %v38 = vld [vmem:[%s4] sm:$0xff]
    %v39 = vld [vmem:[%s4 + $0x8] sm:$0xff]
    %v40 = vld [vmem:[%s0] sm:$0xf]
    %v41 = vld [vmem:[%s0 + $0x4] sm:$0xf]
    %v42 = vld [vmem:[#allocation2] sm:$0xf]
    %v43 = vld [vmem:[#allocation2 + $0x4] sm:$0xf]
    %v44 = vld [vmem:[#allocation2 + $0x8] sm:$0xf]
    %v45 = vld [vmem:[#allocation2 + $0xc] sm:$0xf]
    %v46 = vld [vmem:[#allocation2 + $0x10] sm:$0xf]
    %v47 = vld [vmem:[#allocation2 + $0x14] sm:$0xf]
    %v48 = vld [vmem:[#allocation2 + $0x18] sm:$0xf]
    %v49 = vld [vmem:[#allocation2 + $0x1c] sm:$0xf]
    %v50 = vld [vmem:[#allocation2 + $0x20] sm:$0xf]
    %v51 = vld [vmem:[#allocation2 + $0x24] sm:$0xf]
    %v52 = vld [vmem:[#allocation2 + $0x28] sm:$0xf]
    %v53 = vld [vmem:[#allocation2 + $0x2c] sm:$0xf]
    %v54 = vld [vmem:[#allocation2 + $0x30] sm:$0xf]
    %v55 = vld [vmem:[#allocation2 + $0x34] sm:$0xf]
    %v56 = vld [vmem:[#allocation2 + $0x38] sm:$0xf]
    %v57 = vld [vmem:[#allocation2 + $0x3c] sm:$0xf]
    %v60 = vunpack.c.l.b16 %v40
    %v61 = vunpack.c.l.b16 %v41
    %v62 = vpack.c.b16 %v61, %v60
    %v80 = vunpack.c.l.b16 %v42
    %v81 = vunpack.c.l.b16 %v43
    %v82 = vunpack.c.l.b16 %v44
    %v83 = vunpack.c.l.b16 %v45
    %v84 = vunpack.c.l.b16 %v46
    %v85 = vunpack.c.l.b16 %v47
    %v86 = vunpack.c.l.b16 %v48
    %v87 = vunpack.c.l.b16 %v49
    %v88 = vunpack.c.l.b16 %v50
    %v89 = vunpack.c.l.b16 %v51
    %v90 = vunpack.c.l.b16 %v52
    %v91 = vunpack.c.l.b16 %v53
    %v92 = vunpack.c.l.b16 %v54
    %v93 = vunpack.c.l.b16 %v55
    %v94 = vunpack.c.l.b16 %v56
    %v95 = vunpack.c.l.b16 %v57
    %v96 = vpack.c.b16 %v81, %v80
    %v97 = vpack.c.b16 %v83, %v82
    %v98 = vpack.c.b16 %v85, %v84
    %v99 = vpack.c.b16 %v87, %v86
    %v100 = vpack.c.b16 %v89, %v88
    %v101 = vpack.c.b16 %v91, %v90
    %v102 = vpack.c.b16 %v93, %v92
    %v103 = vpack.c.b16 %v95, %v94
    %112 = vmatprep.subr.bf16.mxu0 0
    %113 = vmatpush1.bf16.msra.mxu0 %v96
    %114 = vmatprep.subr.bf16.mxu0 0
    %115 = vmatpush1.bf16.msra.mxu0 %v97
    %116 = vmatprep.subr.bf16.mxu0 0
    %117 = vmatpush1.bf16.msra.mxu0 %v98
    %118 = vmatprep.subr.bf16.mxu0 0
    %119 = vmatpush1.bf16.msra.mxu0 %v99
    %120 = vmatprep.subr.bf16.mxu0 0
    %121 = vmatpush1.bf16.msra.mxu0 %v100
    %122 = vmatprep.subr.bf16.mxu0 0
    %123 = vmatpush1.bf16.msra.mxu0 %v101
    %124 = vmatprep.subr.bf16.mxu0 0
    %125 = vmatpush1.bf16.msra.mxu0 %v102
    %126 = vmatprep.subr.bf16.mxu0 0
    %127 = vmatpush1.bf16.msra.mxu0 %v103
    %128 = vmatprep.subr.bf16.mxu0 0
    %129 = vmatpush1.bf16.msra.mxu0 0
    %130 = vmatprep.subr.bf16.mxu0 0
    %131 = vmatpush1.bf16.msra.mxu0 0
    %132 = vmatprep.subr.bf16.mxu0 0
    %133 = vmatpush1.bf16.msra.mxu0 0
    %134 = vmatprep.subr.bf16.mxu0 0
    %135 = vmatpush1.bf16.msra.mxu0 0
    %136 = vmatprep.subr.bf16.mxu0 0
    %137 = vmatpush1.bf16.msra.mxu0 0
    %138 = vmatprep.subr.bf16.mxu0 0
    %139 = vmatpush1.bf16.msra.mxu0 0
    %140 = vmatprep.subr.bf16.mxu0 0
    %141 = vmatpush1.bf16.msra.mxu0 0
    %142 = vmatprep.subr.bf16.mxu0 0
    %143 = vmatpush1.bf16.msra.mxu0 0
    %144 = vmatprep.mubr.bf16.mxu0 0
    %145 = vmatmul.mubr.bf16.gmra.mrb[0].mxu0 %v62
    %v146 = vpop.f32.mrb[0].mxu0
    %v147 = vadd.f32 0.0, %v146
    %v148 = vpop.f32.mrb[0].mxu0
    %v149 = vpop.f32.mrb[0].mxu0
    %v150 = vadd.f32 0.0, %v149
    %v151 = vpop.f32.mrb[0].mxu0
    %152 = vdwg.mxu0
    %v153 = vadd.f32 %v38, %v147
    %v154 = vadd.f32 %v39, %v150
    %155 = vst [vmem:[%s4] sm:$0xff] %v153
    %156 = vst [vmem:[%s4 + $0x8] sm:$0xff] %v154
    // Predicated region
    $region26: #{l_guidance_apply.1} parent=1 // pred_check
      %p157 = pneg %p32
    $region27: #{l_guidance_apply.1} parent=1 // pred_check_branch
      %159 = sbr.rel (%p157) target = $region29
    $region28: #{l_guidance_apply.1} parent=1 // pred_region
      %v160 = vld [vmem:[%s4] sm:$0xff]
      %v161 = vld [vmem:[%s4 + $0x8] sm:$0xff]
      %v162 = vld [vmem:[%s2] sm:$0x1]
      %v164 = vlaneseq
      %v165 = vshrl.u32 %v164, 7
      %v166 = vsub.s32 0, %v165
      %v167 = vrot.slane %v162, %v166
      %v169 = vadd.f32 %v160, %v167
      %v170 = vadd.f32 %v161, %v167
      %v171 = vld [vmem:[%s3] sm:$0x1]
      %v173 = vlaneseq
      %v174 = vshrl.u32 %v173, 7
      %v175 = vsub.s32 0, %v174
      %v176 = vrot.slane %v171, %v175
      %v178 = vmul.f32 %v169, %v176
      %v179 = vmul.f32 %v170, %v176
      %180 = vst [vmem:[%s4] sm:$0xff] %v178
      %181 = vst [vmem:[%s4 + $0x8] sm:$0xff] %v179
    $region29: #{l_guidance_apply.1} parent=1 // pred_fallthru
      _
    // Predicated region
    $region30: #{l_guidance_apply.1} parent=1 // pred_check
      _
    $region31: #{l_guidance_apply.1} parent=1 // pred_check_branch
      %183 = sbr.rel (0) target = $region33
    $region32: #{l_guidance_apply.1} parent=1 // pred_region
      _
    $region33: #{l_guidance_apply.1} parent=1 // pred_fallthru
      _
    // Predicated region
    $region34: #{l_guidance_apply.1} parent=1 // pred_check
      _
    $region35: #{l_guidance_apply.1} parent=1 // pred_check_branch
      %185 = sbr.rel (0) target = $region37
    $region36: #{l_guidance_apply.1} parent=1 // pred_region
      _
    $region37: #{l_guidance_apply.1} parent=1 // pred_fallthru
      _
    %186 = vsyncpa [#allocation3], 1

</llo_original>
